<compile_context>
chip_gen: v5e
topology: v5e:2x2
jax: 0.10.0
libtpu: 0.0.40
codegen_flags: <defaults>
</compile_context>

<pallas_src>
import functools

import jax
import jax.numpy as jnp
from jax.experimental import pallas as pl
from jax.experimental.pallas import tpu as pltpu


def _self_output_kernel(x_ref, w1_ref, b1_ref, w2_ref, b2_ref, gamma_ref, beta_ref,
                        o_ref, acc_ref, *, eps):
    k = pl.program_id(1)

    @pl.when(k == 0)
    def _init():
        acc_ref[...] = jnp.zeros_like(acc_ref)

    x = x_ref[...]                                              # (tm, H), native dtype

    # dense_1 (chunk of I) + bias + ReLU; MXU dot in the weight dtype, f32 accumulate.
    h = jnp.dot(x.astype(w1_ref.dtype), w1_ref[...],
                preferred_element_type=jnp.float32)             # (tm, tk) f32
    h = jnp.maximum(h + b1_ref[...], 0.0)
    # TODO(synk): dropout omitted (inference / identity semantics).

    # dense_2 partial product, accumulated in f32 scratch.
    acc_ref[...] += jnp.dot(h.astype(w2_ref.dtype), w2_ref[...],
                            preferred_element_type=jnp.float32)  # (tm, H) f32

    @pl.when(k == pl.num_programs(1) - 1)
    def _finalize():
        y = acc_ref[...] + b2_ref[...]                          # (tm, H) f32
        u = jnp.mean(y, axis=-1, keepdims=True)
        d = y - u
        s = jnp.mean(d * d, axis=-1, keepdims=True)
        # gamma folded into the rsqrt scale (single fused multiply), biased variance.
        y_ln = d * (gamma_ref[...] * jax.lax.rsqrt(s + eps)) + beta_ref[...]
        o_ref[...] = (y_ln + x.astype(jnp.float32)).astype(o_ref.dtype)


def _round_up(n, m):
    return (n + m - 1) // m * m


def _device_kind():
    try:
        return jax.devices()[0].device_kind.lower()
    except Exception:
        return ""


def _vmem_budget_bytes(kind):
    """~85% of physical VMEM per TensorCore for the current generation."""
    cap = None
    try:
        cap = int(pltpu.get_tpu_info().vmem_capacity_bytes)
    except Exception:
        cap = None
    if not cap or cap <= 0:
        cap = (64 << 20) if "v7" in kind else (128 << 20)
    return int(0.85 * cap)


def _working_set_bytes(tile_m, tile_k, H, x_bytes, o_bytes, w_bytes):
    io = 2 * tile_m * H * (x_bytes + o_bytes)          # double-buffered x / out tiles
    w = 2 * 2 * H * tile_k * w_bytes                   # double-buffered W1/W2 chunks
    rows = 2 * (tile_k + 3 * H) * 4                    # b1 chunk, b2, gamma, beta (f32)
    acc = tile_m * H * 4                               # accumulator scratch
    inter = tile_m * tile_k * 4 + 2 * tile_m * H * 4   # h + epilogue temporaries
    return io + w + rows + acc + inter


def self_output(x, w1, b1, w2, b2, gamma, beta, *, eps=1e-12, tile_m=None, tile_k=None):
    """x: [N, H]; w1: [H, I]; b1: [I]; w2: [I, H]; b2/gamma/beta: [H].

    Pass bf16 weights/activations for the fast MXU path; accumulation and the
    LayerNorm / residual epilogue always run in f32.
    """
    N, H = x.shape
    I = w1.shape[1]
    out_dtype = x.dtype

    kind = _device_kind()
    budget = _vmem_budget_bytes(kind)
    x_bytes = jnp.dtype(x.dtype).itemsize
    o_bytes = jnp.dtype(out_dtype).itemsize
    w_bytes = jnp.dtype(w1.dtype).itemsize

    # Row tile: 256 fills the 256x256 MXUs (v6e/v7x); v5e's 128-tall MXU takes 2 passes.
    if tile_m is None:
        tile_m = 256
    tile_m = max(8, min(_round_up(tile_m, 8), _round_up(N, 8)))
    if "v7" in kind:
        # 2 TensorCores per chip: keep >= 2 row tiles so both cores get work.
        tile_m = min(tile_m, max(8, _round_up(N, 16) // 2))
    n_pad = _round_up(N, tile_m)

    # K tile over the intermediate dim: full I when it fits the VMEM budget, else
    # shrink in multiples of 128 (reduction grid axis + f32 accumulator scratch).
    if tile_k is None:
        tile_k = I
        while (tile_k > 128 and
               _working_set_bytes(tile_m, tile_k, H, x_bytes, o_bytes, w_bytes) > budget):
            tile_k = _round_up(tile_k // 2, 128)
    tile_k = max(1, min(tile_k, I))
    i_pad = _round_up(I, tile_k)

    # Pad rows of x (sliced off at the end). If I is padded, the extra W1 columns /
    # W2 rows / b1 entries are zero and contribute exactly 0 after ReLU.
    x_in = x if n_pad == N else jnp.pad(x, ((0, n_pad - N), (0, 0)))
    if i_pad != I:
        w1 = jnp.pad(w1, ((0, 0), (0, i_pad - I)))
        w2 = jnp.pad(w2, ((0, i_pad - I), (0, 0)))
        b1 = jnp.pad(b1, (0, i_pad - I))

    b1_2d = b1.reshape(1, i_pad).astype(jnp.float32)
    b2_2d = b2.reshape(1, H).astype(jnp.float32)
    gamma_2d = gamma.reshape(1, H).astype(jnp.float32)
    beta_2d = beta.reshape(1, H).astype(jnp.float32)

    grid = (n_pad // tile_m, i_pad // tile_k)

    vmem_limit = int(min(
        budget,
        max(32 << 20,
            _working_set_bytes(tile_m, tile_k, H, x_bytes, o_bytes, w_bytes) + (8 << 20))))

    cost = pl.CostEstimate(
        flops=4 * n_pad * H * i_pad,                       # two matmuls, 2 flops/MAC
        transcendentals=n_pad,                             # one rsqrt per row
        bytes_accessed=(n_pad * H * (x_bytes + o_bytes)
                        + 2 * H * i_pad * w_bytes
                        + (i_pad + 3 * H) * 4),
    )

    kernel = functools.partial(_self_output_kernel, eps=eps)
    out = pl.pallas_call(
        kernel,
        out_shape=jax.ShapeDtypeStruct((n_pad, H), out_dtype),
        grid_spec=pltpu.PrefetchScalarGridSpec(
            num_scalar_prefetch=0,
            grid=grid,
            in_specs=[
                pl.BlockSpec((tile_m, H), lambda i, k: (i, 0)),   # x row tile (held across k)
                pl.BlockSpec((H, tile_k), lambda i, k: (0, k)),   # W1 k-chunk
                pl.BlockSpec((1, tile_k), lambda i, k: (0, k)),   # b1 k-chunk (f32)
                pl.BlockSpec((tile_k, H), lambda i, k: (k, 0)),   # W2 k-chunk
                pl.BlockSpec((1, H), lambda i, k: (0, 0)),        # b2 (f32)
                pl.BlockSpec((1, H), lambda i, k: (0, 0)),        # gamma (f32)
                pl.BlockSpec((1, H), lambda i, k: (0, 0)),        # beta (f32)
            ],
            out_specs=pl.BlockSpec((tile_m, H), lambda i, k: (i, 0)),
            scratch_shapes=[pltpu.VMEM((tile_m, H), jnp.float32)],
        ),
        compiler_params=pltpu.CompilerParams(
            dimension_semantics=("parallel", "arbitrary"),
            vmem_limit_bytes=vmem_limit,
        ),
        cost_estimate=cost,
    )(x_in, w1, b1_2d, w2, b2_2d, gamma_2d, beta_2d)

    return out if n_pad == N else out[:N]


def _reference(x, w1, b1, w2, b2, gamma, beta, eps=1e-12):
    hi = jax.lax.Precision.HIGHEST
    h = jnp.maximum(jnp.dot(x, w1, precision=hi) + b1, 0.0)
    y = jnp.dot(h, w2, precision=hi) + b2
    u = jnp.mean(y, axis=-1, keepdims=True)
    s = jnp.mean((y - u) ** 2, axis=-1, keepdims=True)
    return gamma * ((y - u) / jnp.sqrt(s + eps)) + beta + x


def _make_params(key, H, I):
    k1, k2, k3, k4, k5, k6 = jax.random.split(key, 6)
    bound1 = 1.0 / (H ** 0.5)
    bound2 = 1.0 / (I ** 0.5)
    w1 = jax.random.uniform(k1, (H, I), jnp.float32, -bound1, bound1)   # dense_1.weight^T
    b1 = jax.random.uniform(k2, (I,), jnp.float32, -bound1, bound1)
    w2 = jax.random.uniform(k3, (I, H), jnp.float32, -bound2, bound2)   # dense_2.weight^T
    b2 = jax.random.uniform(k4, (H,), jnp.float32, -bound2, bound2)
    gamma = jax.random.uniform(k5, (H,), jnp.float32, 0.5, 1.5)
    beta = jax.random.uniform(k6, (H,), jnp.float32, -0.5, 0.5)
    return w1, b1, w2, b2, gamma, beta


if __name__ == "__main__":
    key = jax.random.PRNGKey(0)
    kx1, kp1, kx2, kp2 = jax.random.split(key, 4)

    # Test 1: small shapes consistent with the module (batch=2, seq=8, hidden=32,
    # intermediate=64), f32 end-to-end, single-tile grid.
    B, S, H, I = 2, 8, 32, 64
    x = jax.random.normal(kx1, (B, S, H), dtype=jnp.float32)
    w1, b1, w2, b2, gamma, beta = _make_params(kp1, H, I)

    x2d = x.reshape(B * S, H)
    out = self_output(x2d, w1, b1, w2, b2, gamma, beta).reshape(B, S, H)
    jax.block_until_ready(out)
    ref = _reference(x2d, w1, b1, w2, b2, gamma, beta).reshape(B, S, H)
    assert jnp.allclose(out, ref, atol=2e-2, rtol=2e-2), "mismatch vs reference (small f32)"

    # Test 2: exercises row padding (400 -> 512), multi-tile row grid and the
    # I-reduction (K-tiled) path with the f32 accumulator scratch.
    N2, H2, I2 = 400, 128, 256
    x2 = jax.random.normal(kx2, (N2, H2), dtype=jnp.float32)
    w1b, b1b, w2b, b2b, gb, bb = _make_params(kp2, H2, I2)
    out2 = self_output(x2, w1b, b1b, w2b, b2b, gb, bb, tile_m=128, tile_k=128)
    jax.block_until_ready(out2)
    ref2 = _reference(x2, w1b, b1b, w2b, b2b, gb, bb)
    assert jnp.allclose(out2, ref2, atol=2e-2, rtol=2e-2), "mismatch vs reference (k-tiled)"

    # Test 3: bf16 activations + weights (fast MXU path) with f32 accumulation,
    # compared (loosely) against an f32 reference on the bf16-rounded inputs.
    xb = x2d.astype(jnp.bfloat16)
    w1h, w2h = w1.astype(jnp.bfloat16), w2.astype(jnp.bfloat16)
    out3 = self_output(xb, w1h, b1, w2h, b2, gamma, beta)
    jax.block_until_ready(out3)
    ref3 = _reference(xb.astype(jnp.float32), w1h.astype(jnp.float32), b1,
                      w2h.astype(jnp.float32), b2, gamma, beta)
    assert jnp.allclose(out3.astype(jnp.float32), ref3, atol=1e-1, rtol=1e-1), \
        "mismatch vs reference (bf16)"

    print("KERNEL_OK")
</pallas_src>

<mosaic_0001>
module attributes {stable_mosaic.version = 11 : i64} {
  func.func @_self_output_kernel(%arg0: i32, %arg1: i32, %arg2: memref<16x32xf32, #tpu.memory_space<vmem>>, %arg3: memref<32x64xf32, #tpu.memory_space<vmem>>, %arg4: memref<1x64xf32, #tpu.memory_space<vmem>>, %arg5: memref<64x32xf32, #tpu.memory_space<vmem>>, %arg6: memref<1x32xf32, #tpu.memory_space<vmem>>, %arg7: memref<1x32xf32, #tpu.memory_space<vmem>>, %arg8: memref<1x32xf32, #tpu.memory_space<vmem>>, %arg9: memref<16x32xf32, #tpu.memory_space<vmem>>, %arg10: memref<16x32xf32, #tpu.memory_space<vmem>>) attributes {dimension_semantics = [#tpu.dimension_semantics<parallel>, #tpu.dimension_semantics<arbitrary>], iteration_bounds = array<i64: 1, 1>, scalar_prefetch = 0 : i64, scratch_operands = 1 : i64, tpu.core_type = #tpu.core_type<tc>, window_params = [{transform_indices = @transform_0, window_bounds = array<i64: 16, 32>}, {transform_indices = @transform_1, window_bounds = array<i64: 32, 64>}, {transform_indices = @transform_2, window_bounds = array<i64: 1, 64>}, {transform_indices = @transform_3, window_bounds = array<i64: 64, 32>}, {pipeline_mode = #tpu.pipeline_mode<synchronous>, transform_indices = @transform_4, window_bounds = array<i64: 1, 32>}, {pipeline_mode = #tpu.pipeline_mode<synchronous>, transform_indices = @transform_5, window_bounds = array<i64: 1, 32>}, {pipeline_mode = #tpu.pipeline_mode<synchronous>, transform_indices = @transform_6, window_bounds = array<i64: 1, 32>}, {transform_indices = @transform_7, window_bounds = array<i64: 16, 32>}]} {
    %c0_i32 = arith.constant 0 : i32
    %0 = arith.cmpi eq, %arg1, %c0_i32 : i32
    %1 = arith.extui %0 : i1 to i32
    %c0_i32_0 = arith.constant 0 : i32
    %2 = arith.cmpi ne, %1, %c0_i32_0 : i32
    scf.if %2 {
      %cst_16 = arith.constant 0.000000e+00 : f32
      %19 = vector.broadcast %cst_16 : f32 to vector<16x32xf32>
      %c0_17 = arith.constant 0 : index
      %c0_18 = arith.constant 0 : index
      %20 = vector.load %arg10[%c0_17, %c0_18] : memref<16x32xf32, #tpu.memory_space<vmem>>, vector<16x32xf32>
      tpu.vector_store %arg10[%c0_17, %c0_18], %19 {strides = array<i32>} : memref<16x32xf32, #tpu.memory_space<vmem>>, vector<16x32xf32>,
    } else {
    }
    %c0 = arith.constant 0 : index
    %c0_1 = arith.constant 0 : index
    %3 = vector.load %arg2[%c0, %c0_1] : memref<16x32xf32, #tpu.memory_space<vmem>>, vector<16x32xf32>
    %c0_2 = arith.constant 0 : index
    %c0_3 = arith.constant 0 : index
    %4 = vector.load %arg3[%c0_2, %c0_3] : memref<32x64xf32, #tpu.memory_space<vmem>>, vector<32x64xf32>
    %cst = arith.constant dense<0.000000e+00> : vector<16x64xf32>
    %5 = tpu.matmul %3, %4, %cst {dimension_numbers = #tpu.dot_dimension_numbers<[1], [0], [0], [1], [0, 0, 1, 1], [], []>} : vector<16x32xf32>, vector<32x64xf32>, vector<16x64xf32> -> vector<16x64xf32>
    %c0_4 = arith.constant 0 : index
    %c0_5 = arith.constant 0 : index
    %6 = vector.load %arg4[%c0_4, %c0_5] : memref<1x64xf32, #tpu.memory_space<vmem>>, vector<1x64xf32>
    %7 = vector.broadcast %6 : vector<1x64xf32> to vector<16x64xf32>
    %8 = arith.addf %5, %7 : vector<16x64xf32>
    %cst_6 = arith.constant 0.000000e+00 : f32
    %9 = vector.broadcast %cst_6 : f32 to vector<16x64xf32>
    %10 = arith.maximumf %8, %9 : vector<16x64xf32>
    %c0_7 = arith.constant 0 : index
    %c0_8 = arith.constant 0 : index
    %11 = vector.load %arg10[%c0_7, %c0_8] : memref<16x32xf32, #tpu.memory_space<vmem>>, vector<16x32xf32>
    %c0_9 = arith.constant 0 : index
    %c0_10 = arith.constant 0 : index
    %12 = vector.load %arg5[%c0_9, %c0_10] : memref<64x32xf32, #tpu.memory_space<vmem>>, vector<64x32xf32>
    %cst_11 = arith.constant dense<0.000000e+00> : vector<16x32xf32>
    %13 = tpu.matmul %10, %12, %cst_11 {dimension_numbers = #tpu.dot_dimension_numbers<[1], [0], [0], [1], [0, 0, 1, 1], [], []>} : vector<16x64xf32>, vector<64x32xf32>, vector<16x32xf32> -> vector<16x32xf32>
    %14 = arith.addf %11, %13 : vector<16x32xf32>
    %c0_12 = arith.constant 0 : index
    %c0_13 = arith.constant 0 : index
    %15 = vector.load %arg10[%c0_12, %c0_13] : memref<16x32xf32, #tpu.memory_space<vmem>>, vector<16x32xf32>
    tpu.vector_store %arg10[%c0_12, %c0_13], %14 {strides = array<i32>} : memref<16x32xf32, #tpu.memory_space<vmem>>, vector<16x32xf32>,
    %c0_i32_14 = arith.constant 0 : i32
    %16 = arith.cmpi eq, %arg1, %c0_i32_14 : i32
    %17 = arith.extui %16 : i1 to i32
    %c0_i32_15 = arith.constant 0 : i32
    %18 = arith.cmpi ne, %17, %c0_i32_15 : i32
    scf.if %18 {
      %c0_16 = arith.constant 0 : index
      %c0_17 = arith.constant 0 : index
      %19 = vector.load %arg10[%c0_16, %c0_17] : memref<16x32xf32, #tpu.memory_space<vmem>>, vector<16x32xf32>
      %c0_18 = arith.constant 0 : index
      %c0_19 = arith.constant 0 : index
      %20 = vector.load %arg6[%c0_18, %c0_19] : memref<1x32xf32, #tpu.memory_space<vmem>>, vector<1x32xf32>
      %21 = vector.broadcast %20 : vector<1x32xf32> to vector<16x32xf32>
      %22 = arith.addf %19, %21 : vector<16x32xf32>
      %cst_20 = arith.constant dense<0.000000e+00> : vector<16xf32>
      %23 = vector.multi_reduction <add>, %22, %cst_20 [1] : vector<16x32xf32> to vector<16xf32>
      %24 = vector.shape_cast %23 : vector<16xf32> to vector<16x1xf32>
      %cst_21 = arith.constant 3.200000e+01 : f32
      %25 = vector.broadcast %cst_21 : f32 to vector<16x1xf32>
      %26 = arith.divf %24, %25 : vector<16x1xf32>
      %27 = vector.broadcast %26 : vector<16x1xf32> to vector<16x32xf32>
      %28 = arith.subf %22, %27 : vector<16x32xf32>
      %29 = arith.mulf %28, %28 : vector<16x32xf32>
      %cst_22 = arith.constant dense<0.000000e+00> : vector<16xf32>
      %30 = vector.multi_reduction <add>, %29, %cst_22 [1] : vector<16x32xf32> to vector<16xf32>
      %31 = vector.shape_cast %30 : vector<16xf32> to vector<16x1xf32>
      %cst_23 = arith.constant 3.200000e+01 : f32
      %32 = vector.broadcast %cst_23 : f32 to vector<16x1xf32>
      %33 = arith.divf %31, %32 : vector<16x1xf32>
      %c0_24 = arith.constant 0 : index
      %c0_25 = arith.constant 0 : index
      %34 = vector.load %arg7[%c0_24, %c0_25] : memref<1x32xf32, #tpu.memory_space<vmem>>, vector<1x32xf32>
      %cst_26 = arith.constant 9.99999996E-13 : f32
      %35 = vector.broadcast %cst_26 : f32 to vector<16x1xf32>
      %36 = arith.addf %33, %35 : vector<16x1xf32>
      %37 = math.rsqrt %36 : vector<16x1xf32>
      %38 = vector.broadcast %34 : vector<1x32xf32> to vector<16x32xf32>
      %39 = vector.broadcast %37 : vector<16x1xf32> to vector<16x32xf32>
      %40 = arith.mulf %38, %39 : vector<16x32xf32>
      %41 = arith.mulf %28, %40 : vector<16x32xf32>
      %c0_27 = arith.constant 0 : index
      %c0_28 = arith.constant 0 : index
      %42 = vector.load %arg8[%c0_27, %c0_28] : memref<1x32xf32, #tpu.memory_space<vmem>>, vector<1x32xf32>
      %43 = vector.broadcast %42 : vector<1x32xf32> to vector<16x32xf32>
      %44 = arith.addf %41, %43 : vector<16x32xf32>
      %45 = arith.addf %44, %3 : vector<16x32xf32>
      %c0_29 = arith.constant 0 : index
      %c0_30 = arith.constant 0 : index
      %46 = vector.load %arg9[%c0_29, %c0_30] : memref<16x32xf32, #tpu.memory_space<vmem>>, vector<16x32xf32>
      tpu.vector_store %arg9[%c0_29, %c0_30], %45 {strides = array<i32>} : memref<16x32xf32, #tpu.memory_space<vmem>>, vector<16x32xf32>,
    } else {
    }
    return
  }
  func.func @transform_0(%arg0: i32, %arg1: i32) -> (i32, i32) {
    %c0_i32 = arith.constant 0 : i32
    %c0_i32_0 = arith.constant 0 : i32
    return %arg0, %c0_i32 : i32, i32
  }
  func.func @transform_1(%arg0: i32, %arg1: i32) -> (i32, i32) {
    %c0_i32 = arith.constant 0 : i32
    %c0_i32_0 = arith.constant 0 : i32
    return %c0_i32, %arg1 : i32, i32
  }
  func.func @transform_2(%arg0: i32, %arg1: i32) -> (i32, i32) {
    %c0_i32 = arith.constant 0 : i32
    %c0_i32_0 = arith.constant 0 : i32
    return %c0_i32, %arg1 : i32, i32
  }
  func.func @transform_3(%arg0: i32, %arg1: i32) -> (i32, i32) {
    %c0_i32 = arith.constant 0 : i32
    %c0_i32_0 = arith.constant 0 : i32
    return %arg1, %c0_i32 : i32, i32
  }
  func.func @transform_4(%arg0: i32, %arg1: i32) -> (i32, i32) {
    %c0_i32 = arith.constant 0 : i32
    %c0_i32_0 = arith.constant 0 : i32
    %c0_i32_1 = arith.constant 0 : i32
    return %c0_i32, %c0_i32_0 : i32, i32
  }
  func.func @transform_5(%arg0: i32, %arg1: i32) -> (i32, i32) {
    %c0_i32 = arith.constant 0 : i32
    %c0_i32_0 = arith.constant 0 : i32
    %c0_i32_1 = arith.constant 0 : i32
    return %c0_i32, %c0_i32_0 : i32, i32
  }
  func.func @transform_6(%arg0: i32, %arg1: i32) -> (i32, i32) {
    %c0_i32 = arith.constant 0 : i32
    %c0_i32_0 = arith.constant 0 : i32
    %c0_i32_1 = arith.constant 0 : i32
    return %c0_i32, %c0_i32_0 : i32, i32
  }
  func.func @transform_7(%arg0: i32, %arg1: i32) -> (i32, i32) {
    %c0_i32 = arith.constant 0 : i32
    %c0_i32_0 = arith.constant 0 : i32
    return %arg0, %c0_i32 : i32, i32
  }
}

</mosaic_0001>

<llo_original>
// kernel: tpu_custom_call.1
$region0: #{tpu_custom_call.1}
  #allocation0 [shape = 'u32[]', space=smem, size = 0x4, offset = 0x4, fixed_abs, tag = 'smem constant byte address 0x4 - core index']
  #allocation1 [shape = 'u32[72,128]{1,0:T(1,128)}', space=vmem, size = 0x9000, scoped, tag = 'internal scratch']
  #allocation2 [shape = 'f32[16,32]{1,0:T(8,128)}', space=vmem, size = 0x2000, scoped, tag = 'scratch operand']
  %s0 = inlined_call_operand.vmem [shape: f32[16,32], index: 0, kind: input, shape index: {}]
  %s1 = inlined_call_operand.vmem [shape: f32[32,64], index: 1, kind: input, shape index: {}]
  %s2 = inlined_call_operand.vmem [shape: f32[1,64], index: 2, kind: input, shape index: {}]
  %s3 = inlined_call_operand.vmem [shape: f32[64,32], index: 3, kind: input, shape index: {}]
  %s4 = inlined_call_operand.vmem [shape: f32[1,32], index: 4, kind: input, shape index: {}]
  %s5 = inlined_call_operand.vmem [shape: f32[1,32], index: 5, kind: input, shape index: {}]
  %s6 = inlined_call_operand.vmem [shape: f32[1,32], index: 6, kind: input, shape index: {}]
  %s7 = inlined_call_operand.hbm [shape: f32[16,32], index: 7, kind: output, shape index: {}]
  %s8 = sld [smem:[#allocation0]]
  $region46: #{tpu_custom_call.1} parent=0
    _
  %s10 = ssub.s32 1, %s8
  %s11 = scalar_select 0, %s10, %s8
  $region1: #{tpu_custom_call.1} parent=0
    #allocation3 [shape = 'u8[8192]{0}', space=vmem, size = 0x2000, scoped, tag = 'output window, operand 0, single buffered']
    #allocation4 [shape = 's32[1]{0}', space=sflag, size = 0x4, scoped, tag = 'scoped memory for tpu_custom_call.1']
    %12 = vsyncpa [#allocation4], 0
    // Predicated region
    $region2: #{tpu_custom_call.1} parent=1 // pred_check
      _
    $region3: #{tpu_custom_call.1} parent=1 // pred_check_branch
      %14 = sbr.rel (0) target = $region5
    $region4: #{tpu_custom_call.1} parent=1 // pred_region
      _
    $region5: #{tpu_custom_call.1} parent=1 // pred_fallthru
      _
    // Predicated region
    $region6: #{tpu_custom_call.1} parent=1 // pred_check
      _
    $region7: #{tpu_custom_call.1} parent=1 // pred_check_branch
      %16 = sbr.rel (0) target = $region9
    $region8: #{tpu_custom_call.1} parent=1 // pred_region
      _
    $region9: #{tpu_custom_call.1} parent=1 // pred_fallthru
      _
    // Predicated region
    $region10: #{tpu_custom_call.1} parent=1 // pred_check
      _
    $region11: #{tpu_custom_call.1} parent=1 // pred_check_branch
      %18 = sbr.rel (0) target = $region13
    $region12: #{tpu_custom_call.1} parent=1 // pred_region
      _
    $region13: #{tpu_custom_call.1} parent=1 // pred_fallthru
      _
    // Predicated region
    $region14: #{tpu_custom_call.1} parent=1 // pred_check
      _
    $region15: #{tpu_custom_call.1} parent=1 // pred_check_branch
      %20 = sbr.rel (0) target = $region17
    $region16: #{tpu_custom_call.1} parent=1 // pred_region
      _
    $region17: #{tpu_custom_call.1} parent=1 // pred_fallthru
      _
    // Predicated region
    $region18: #{tpu_custom_call.1} parent=1 // pred_check
      _
    $region19: #{tpu_custom_call.1} parent=1 // pred_check_branch
      %22 = sbr.rel (0) target = $region21
    $region20: #{tpu_custom_call.1} parent=1 // pred_region
      _
    $region21: #{tpu_custom_call.1} parent=1 // pred_fallthru
      _
    // Predicated region
    $region22: #{tpu_custom_call.1} parent=1 // pred_check
      _
    $region23: #{tpu_custom_call.1} parent=1 // pred_check_branch
      %24 = sbr.rel (0) target = $region25
    $region24: #{tpu_custom_call.1} parent=1 // pred_region
      _
    $region25: #{tpu_custom_call.1} parent=1 // pred_fallthru
      _
    // Predicated region
    $region26: #{tpu_custom_call.1} parent=1 // pred_check
      _
    $region27: #{tpu_custom_call.1} parent=1 // pred_check_branch
      %26 = sbr.rel (0) target = $region29
    $region28: #{tpu_custom_call.1} parent=1 // pred_region
      _
    $region29: #{tpu_custom_call.1} parent=1 // pred_fallthru
      _
    %p27 = scmp.eq.s32.totalorder 0, 0
    // Predicated region
    $region30: #{tpu_custom_call.1} parent=1 // pred_check
      %p28 = pneg %p27
    $region31: #{tpu_custom_call.1} parent=1 // pred_check_branch
      %30 = sbr.rel (%p28) target = $region33
    $region32: #{tpu_custom_call.1} parent=1 // pred_region
      %vm31 = vcmask 261120
      %32 = vst.msk [vmem:[#allocation2] sm:$0xff] %vm31, 0.0
      %33 = vst.msk [vmem:[#allocation2 + $0x8] sm:$0xff] %vm31, 0.0
    $region33: #{tpu_custom_call.1} parent=1 // pred_fallthru
      _
    %v34 = vld [vmem:[%s0] sm:$0xff]
    %v35 = vld [vmem:[%s0 + $0x8] sm:$0xff]
    %v36 = vld [vmem:[%s1] sm:$0xff]
    %v37 = vld [vmem:[%s1 + $0x8] sm:$0xff]
    %v38 = vld [vmem:[%s1 + $0x10] sm:$0xff]
    %v39 = vld [vmem:[%s1 + $0x18] sm:$0xff]
    %v40 = vld [vmem:[%s2] sm:$0x1]
    %v42 = vperm.slane %v40, 0
    %vm44 = vcmask 261120
    %v46 = vsel %vm44, %v34, 0
    %v49 = vsel %vm44, %v35, 0
    %51 = vmatpush.msra.mxu0 0.0
    %52 = vmatpush.msra.mxu0 0.0
    %53 = vmatpush.msra.mxu0 0.0
    %54 = vmatpush.msra.mxu0 0.0
    %55 = vmatpush.msra.mxu0 0.0
    %56 = vmatpush.msra.mxu0 0.0
    %57 = vmatpush.msra.mxu0 0.0
    %58 = vmatpush.msra.mxu0 0.0
    %59 = vmatpush.msra.mxu0 0.0
    %60 = vmatpush.msra.mxu0 0.0
    %61 = vmatpush.msra.mxu0 0.0
    %62 = vmatpush.msra.mxu0 0.0
    %63 = vmatpush.msra.mxu0 %v39
    %64 = vmatpush.msra.mxu0 %v38
    %65 = vmatpush.msra.mxu0 %v37
    %66 = vmatpush.msra.mxu0 %v36
    %67 = vmatmul.f32.gmra.mxu0 %v46
    %v68 = vpop.f32.mrf.mxu0
    %v69 = vadd.f32 %v42, %v68
    %70 = vmatmul.f32.gmra.mxu0 %v49
    %v71 = vpop.f32.mrf.mxu0
    %v72 = vadd.f32 %v42, %v71
    %73 = vdwg.mxu0
    %v74 = vmax.f32 %v69, 0.0
    %v75 = vmax.f32 %v72, 0.0
    %v76 = vld [vmem:[#allocation2] sm:$0xff]
    %v77 = vld [vmem:[#allocation2 + $0x8] sm:$0xff]
    %v78 = vld [vmem:[%s3] sm:$0xff]
    %v79 = vld [vmem:[%s3 + $0x8] sm:$0xff]
    %v80 = vld [vmem:[%s3 + $0x10] sm:$0xff]
    %v81 = vld [vmem:[%s3 + $0x18] sm:$0xff]
    %v82 = vld [vmem:[%s3 + $0x20] sm:$0xff]
    %v83 = vld [vmem:[%s3 + $0x28] sm:$0xff]
    %v84 = vld [vmem:[%s3 + $0x30] sm:$0xff]
    %v85 = vld [vmem:[%s3 + $0x38] sm:$0xff]
    %vm86 = vcmask 523264
    %v88 = vsel %vm86, %v74, 0
    %v91 = vsel %vm86, %v75, 0
    %93 = vmatpush.msra.mxu0 0.0
    %94 = vmatpush.msra.mxu0 0.0
    %95 = vmatpush.msra.mxu0 0.0
    %96 = vmatpush.msra.mxu0 0.0
    %97 = vmatpush.msra.mxu0 0.0
    %98 = vmatpush.msra.mxu0 0.0
    %99 = vmatpush.msra.mxu0 0.0
    %100 = vmatpush.msra.mxu0 0.0
    %101 = vmatpush.msra.mxu0 %v85
    %102 = vmatpush.msra.mxu0 %v84
    %103 = vmatpush.msra.mxu0 %v83
    %104 = vmatpush.msra.mxu0 %v82
    %105 = vmatpush.msra.mxu0 %v81
    %106 = vmatpush.msra.mxu0 %v80
    %107 = vmatpush.msra.mxu0 %v79
    %108 = vmatpush.msra.mxu0 %v78
    %109 = vmatmul.f32.gmra.mxu0 %v88
    %v110 = vpop.f32.mrf.mxu0
    %v111 = vadd.f32 0.0, %v110
    %112 = vmatmul.f32.gmra.mxu0 %v91
    %v113 = vpop.f32.mrf.mxu0
    %v114 = vadd.f32 0.0, %v113
    %115 = vdwg.mxu0
    %v116 = vadd.f32 %v76, %v111
    %v117 = vadd.f32 %v77, %v114
    %118 = vst.msk [vmem:[#allocation2] sm:$0xff] %vm44, %v116
    %119 = vst.msk [vmem:[#allocation2 + $0x8] sm:$0xff] %vm44, %v117
    // Predicated region
    $region34: #{tpu_custom_call.1} parent=1 // pred_check
      %p120 = pneg %p27
    $region35: #{tpu_custom_call.1} parent=1 // pred_check_branch
      %122 = sbr.rel (%p120) target = $region37
    $region36: #{tpu_custom_call.1} parent=1 // pred_region
      %v123 = vld [vmem:[#allocation2] sm:$0xff]
      %v124 = vld [vmem:[#allocation2 + $0x8] sm:$0xff]
      %v125 = vld [vmem:[%s4] sm:$0x1]
      %v127 = vperm.slane %v125, 0
      %v129 = vadd.f32 %v123, %v127
      %v130 = vadd.f32 %v124, %v127
      %v131 = vsel %vm44, %v129, 0.0
      %132 = vadd.xlane.f32.xlu0 %v131
      %v133 = vpop.xlane.xlu0 %132
      %v134 = vsel %vm44, %v130, 0.0
      %135 = vadd.xlane.f32.xlu0 %v134
      %v136 = vpop.xlane.xlu0 %135
      %v137 = vrcp.pop 32.0
      %v138 = vmul.f32 32.0, %v137
      %v139 = vsub.f32 1.0, %v138
      %v140 = vmul.f32 %v137, %v139
      %v141 = vadd.f32 %v137, %v140
      %vm142 = vweird.f32 %v137
      %v143 = vsel %vm142, %v137, %v141
      %v144 = vmul.f32 %v133, %v143
      %v145 = vmul.f32 %v136, %v143
      %v146 = vsub.f32 %v129, %v144
      %v147 = vsub.f32 %v130, %v145
      %v148 = vmul.f32 %v146, %v146
      %v149 = vmul.f32 %v147, %v147
      %v150 = vsel %vm44, %v148, 0.0
      %151 = vadd.xlane.f32.xlu0 %v150
      %v152 = vpop.xlane.xlu0 %151
      %v153 = vsel %vm44, %v149, 0.0
      %154 = vadd.xlane.f32.xlu0 %v153
      %v155 = vpop.xlane.xlu0 %154
      %v156 = vmul.f32 %v152, %v143
      %v157 = vmul.f32 %v155, %v143
      %v158 = vld [vmem:[%s5] sm:$0x1]
      %v159 = vadd.f32 %v156, 1e-12
      %v160 = vadd.f32 %v157, 1e-12
      %v161 = vrsqrt.pop %v159
      %v162 = vmul.f32 %v161, %v159
      %v163 = vmul.f32 %v162, %v161
      %v164 = vmul.f32 0.5, %v163
      %v165 = vsub.f32 1.5, %v164
      %v166 = vmul.f32 %v161, %v165
      %vm167 = vweird.f32 %v159
      %vm168 = vweird.f32 %v161
      %vm169 = vmor %vm167, %vm168
      %v170 = vsel %vm169, %v161, %v166
      %v171 = vrsqrt.pop %v160
      %v172 = vmul.f32 %v171, %v160
      %v173 = vmul.f32 %v172, %v171
      %v174 = vmul.f32 0.5, %v173
      %v175 = vsub.f32 1.5, %v174
      %v176 = vmul.f32 %v171, %v175
      %vm177 = vweird.f32 %v160
      %vm178 = vweird.f32 %v171
      %vm179 = vmor %vm177, %vm178
      %v180 = vsel %vm179, %v171, %v176
      %v182 = vperm.slane %v158, 0
      %v184 = vmul.f32 %v182, %v170
      %v185 = vmul.f32 %v182, %v180
      %v186 = vmul.f32 %v146, %v184
      %v187 = vmul.f32 %v147, %v185
      %v188 = vld [vmem:[%s6] sm:$0x1]
      %v190 = vperm.slane %v188, 0
      %v192 = vadd.f32 %v186, %v190
      %v193 = vadd.f32 %v187, %v190
      %v194 = vadd.f32 %v192, %v34
      %v195 = vadd.f32 %v193, %v35
      %196 = vst.msk [vmem:[#allocation3] sm:$0xff] %vm44, %v194
      %197 = vst.msk [vmem:[#allocation3 + $0x8] sm:$0xff] %vm44, %v195
    $region37: #{tpu_custom_call.1} parent=1 // pred_fallthru
      _
    // Predicated region
    $region38: #{tpu_custom_call.1} parent=1 // pred_check
      _
    $region39: #{tpu_custom_call.1} parent=1 // pred_check_branch
      %199 = sbr.rel (0) target = $region41
    $region40: #{tpu_custom_call.1} parent=1 // pred_region
      %201 = vsyncadd [#allocation4], 0
      %s202 = sshll.u32 [#allocation3], 4
      %s203 = int_to_ptr.vmem [resolvable:$true] %s202
      %s204 = sshll.u32 %s7, 4
      %s205 = int_to_ptr.hbm [resolvable:$true] %s204
      %210 = dma.vmem_to_hbm [thread:$0]  %s203, 256, %s205, [#allocation4], 128, 128, 8
    $region41: #{tpu_custom_call.1} parent=1 // pred_fallthru
      _
    // Predicated region
    $region42: #{tpu_custom_call.1} parent=1 // pred_check
      _
    $region43: #{tpu_custom_call.1} parent=1 // pred_check_branch
      %212 = sbr.rel (0) target = $region45
    $region44: #{tpu_custom_call.1} parent=1 // pred_region
      %214 = dma.done [#allocation4], 256
    $region45: #{tpu_custom_call.1} parent=1 // pred_fallthru
      _
    %215 = vsyncpa [#allocation4], 1

</llo_original>
